<compile_context>
chip_gen: v5e
topology: v5e:2x2
jax: 0.10.0
libtpu: 0.0.40
codegen_flags: <defaults>
</compile_context>

<pallas_src>
import functools
from itertools import permutations

import numpy as np
import jax
import jax.numpy as jnp
from jax.experimental import pallas as pl
from jax.experimental.pallas import tpu as pltpu


# ----------------------------------------------------------------------------
# Host-side construction of the tau_weight table (matches the PyTorch __init__)
# ----------------------------------------------------------------------------
def _weightedtau_np(x, y):
    """scipy.stats.weightedtau(x, y) with default args (rank=True, additive
    hyperbolic weigher 1/(1+r)) for tie-free inputs, in pure numpy."""
    x = np.asarray(x, dtype=np.float64)
    y = np.asarray(y, dtype=np.float64)
    n = len(x)

    def tau_for_rank(rank):
        num = 0.0
        den = 0.0
        for i in range(n):
            for j in range(i + 1, n):
                w = 1.0 / (1.0 + rank[i]) + 1.0 / (1.0 + rank[j])
                num += np.sign(x[i] - x[j]) * np.sign(y[i] - y[j]) * w
                den += w
        return num / den

    def rank_from(primary, secondary):
        perm = np.lexsort((secondary, primary))[::-1]
        r = np.empty(n, dtype=np.int64)
        r[perm] = np.arange(n)
        return r

    return 0.5 * (tau_for_rank(rank_from(x, y)) + tau_for_rank(rank_from(y, x)))


def make_tau_weight(num_rnk, use_tau):
    y = np.array(list(permutations(range(num_rnk), num_rnk)))
    tot = np.array(
        [[_weightedtau_np(2 - i, 2 - j) for j in y] for i in y],
        dtype=np.float32,
    )
    if not use_tau:
        tot = (tot + 1.0) / 2.0
    return tot  # (P, P), P = num_rnk!


# ----------------------------------------------------------------------------
# Pallas kernel: streaming log_softmax + KL cross term, lane-dense batch
# ----------------------------------------------------------------------------
def _wtau_kl_kernel(x_ref, tgt_ref, tau_ext_ref, out_ref, *, num_perm):
    """One (P, TB) tile of transposed logits.

    x_ref:       (P, TB)    logits, batch along lanes (any float dtype).
    tgt_ref:     (1, TB)    i32 target permutation index per column (-1 = pad).
    tau_ext_ref: (P+1, P)   f32; column r = [tau_weight[r, :], H[r]].
    out_ref:     (1, 1, TB) f32 per-lane partial KL sums; resident across the
                 inner (batch-tile) grid axis, written to HBM once per split.
    """
    P = num_perm
    TB = x_ref.shape[-1]

    # Zero the resident accumulator block at the start of each split.
    @pl.when(pl.program_id(1) == 0)
    def _():
        out_ref[...] = jnp.zeros_like(out_ref)

    x = x_ref[...].astype(jnp.float32)                    # (P, TB) f32
    tgt = tgt_ref[...]                                    # (1, TB) i32

    # log_softmax over the permutation (sublane) axis; keep -log_probs.
    m = jnp.max(x, axis=0, keepdims=True)                 # (1, TB)
    z = x - m
    lse = jnp.log(jnp.sum(jnp.exp(z), axis=0, keepdims=True))
    neg_logp = lse - z                                    # (P, TB) = -log_probs

    # Gather w_ext[:, b] = tau_ext[:, target[b]] with P compare+selects on the
    # VPU (tau_ext columns come from the tiny VMEM-resident table).  The
    # target->sublane broadcast is hoisted out of the loop.  Padded / garbage
    # columns (target == -1) match no column and stay 0.
    # TODO(synk): for large P (num_rnk >= 5 -> P >= 120) replace this unrolled
    # select-gather with a one-hot MXU matmul (onehot = iota == tgt).
    tgt_b = jnp.broadcast_to(tgt, (P + 1, TB))            # (P+1, TB)
    w_ext = jnp.zeros((P + 1, TB), jnp.float32)
    for r in range(P):
        col = tau_ext_ref[:, r:r + 1]                     # (P+1, 1), static slice
        w_ext = jnp.where(tgt_b == r, col, w_ext)

    # Per-column KL: sum_p xlogy(w,w) - sum_p w * log_probs
    #              = H[target] + sum_p w_p * (-log_probs_p).
    kl_cols = (jnp.sum(w_ext[:P, :] * neg_logp, axis=0, keepdims=True)
               + w_ext[P:P + 1, :])                       # (1, TB)
    # SELECT (not multiply) so NaN/Inf from garbage ragged-tail lanes cannot
    # propagate into the accumulator.
    kl_cols = jnp.where(tgt >= 0, kl_cols, jnp.float32(0.0))
    out_ref[...] += kl_cols[None, :, :]


# ----------------------------------------------------------------------------
# Wrapper: layout plumbing, grid setup, final batchmean
# ----------------------------------------------------------------------------
def make_weighted_by_tau_loss(num_rnk, use_tau, *, block_b=32768, n_split=2):
    """Returns loss_fn(inputs (B, P) float, target (B,) int) -> scalar f32."""
    assert block_b % 128 == 0, "block_b must be a multiple of 128 (lane width)"
    tau_np = make_tau_weight(num_rnk, use_tau).astype(np.float32)   # (P, P)
    P = tau_np.shape[0]

    # Fold the per-row entropy H[r] = sum_j xlogy(tau[r,j], tau[r,j]) into the
    # gather table as an extra sublane: tau_ext[:, r] = [tau[r, :], H[r]].
    safe = np.where(tau_np > 0.0, tau_np, 1.0)
    ent_np = np.where(tau_np > 0.0, tau_np * np.log(safe), 0.0).sum(axis=1)
    tau_ext_np = np.concatenate([tau_np.T, ent_np[None, :]], axis=0)
    tau_ext = jnp.asarray(tau_ext_np.astype(np.float32))            # (P+1, P)

    kernel = functools.partial(_wtau_kl_kernel, num_perm=P)

    @jax.jit
    def loss_fn(inputs, target):
        B, p_in = inputs.shape
        assert p_in == P
        # Lane-dense layout: batch -> lanes.  Keep the producer dtype through
        # the transpose (cast to f32 happens in-kernel).
        # TODO(synk): if the producer can emit (P, B) directly, skip this
        # transpose entirely (it is a full read+write of the logits in XLA).
        x_t = inputs.T                                     # (P, B)
        tgt = target.astype(jnp.int32).reshape(1, B)       # (1, B)

        block_eff = min(block_b, ((B + 127) // 128) * 128)
        n_x_blocks = pl.cdiv(B, block_eff)                 # valid logits blocks
        n_split_eff = max(1, min(n_split, n_x_blocks))     # don't over-split
        tiles = pl.cdiv(n_x_blocks, n_split_eff)           # inner tiles / split
        coverage = n_split_eff * tiles * block_eff

        # Only the tiny int32 target row is padded; -1 marks masked columns.
        if coverage != B:
            tgt = jnp.pad(tgt, ((0, 0), (0, coverage - B)), constant_values=-1)

        last_block = n_x_blocks - 1

        def x_map(s, t):
            # Clamp: fully-out-of-range tiles re-read the last valid block;
            # their (padded) targets are -1 so they contribute exactly 0.
            return (0, jnp.minimum(s * tiles + t, last_block))

        def tgt_map(s, t):
            return (0, s * tiles + t)

        partials = pl.pallas_call(
            kernel,
            out_shape=jax.ShapeDtypeStruct((n_split_eff, 1, block_eff),
                                           jnp.float32),
            grid_spec=pltpu.PrefetchScalarGridSpec(
                num_scalar_prefetch=0,
                grid=(n_split_eff, tiles),
                in_specs=[
                    pl.BlockSpec((P, block_eff), x_map),
                    pl.BlockSpec((1, block_eff), tgt_map),
                    pl.BlockSpec((P + 1, P), lambda s, t: (0, 0)),
                ],
                out_specs=pl.BlockSpec((1, 1, block_eff),
                                       lambda s, t: (s, 0, 0)),
            ),
            compiler_params=pltpu.CompilerParams(
                dimension_semantics=("parallel", "arbitrary")),
        )(x_t, tgt, tau_ext)

        # KLDivLoss(reduction='batchmean'): sum over the real batch / B.
        return jnp.sum(partials) / jnp.float32(B)

    return loss_fn


# Pure-JAX reference for sanity checking.
def _ref_loss(inputs, target, tau_weight):
    w = tau_weight[target]
    logp = jax.nn.log_softmax(inputs.astype(jnp.float32), axis=-1)
    xlogy = jnp.where(w > 0, w * jnp.log(jnp.where(w > 0, w, 1.0)), 0.0)
    return jnp.sum(xlogy - w * logp) / inputs.shape[0]


if __name__ == "__main__":
    num_rnk = 3            # -> P = 3! = 6 permutations
    use_tau = False        # PyTorch-equivalent path (weights in [0, 1])
    B = 300                # exercises partial edge blocks + -1 masking

    tau_weight = jnp.asarray(make_tau_weight(num_rnk, use_tau), dtype=jnp.float32)
    P = tau_weight.shape[0]

    key = jax.random.PRNGKey(0)
    k_in, k_tgt = jax.random.split(key)
    inputs = jax.random.normal(k_in, (B, P), dtype=jnp.float32)
    target = jax.random.randint(k_tgt, (B,), 0, P, dtype=jnp.int32)

    ref = jax.block_until_ready(_ref_loss(inputs, target, tau_weight))

    # Small tiles: exercises partial blocks, -1 masking, and clamped
    # fully-out-of-range tiles on the 2-way split.
    loss_small = jax.block_until_ready(
        make_weighted_by_tau_loss(num_rnk, use_tau, block_b=128, n_split=2)(
            inputs, target))
    assert np.allclose(np.asarray(loss_small), np.asarray(ref),
                       rtol=1e-5, atol=1e-5), (loss_small, ref)

    # Default (large-tile) configuration.
    loss_default = jax.block_until_ready(
        make_weighted_by_tau_loss(num_rnk, use_tau)(inputs, target))
    assert np.allclose(np.asarray(loss_default), np.asarray(ref),
                       rtol=1e-5, atol=1e-5), (loss_default, ref)

    print("KERNEL_OK")
</pallas_src>

<mosaic_0001>
module attributes {stable_mosaic.version = 11 : i64} {
  func.func @_wtau_kl_kernel(%arg0: i32, %arg1: i32, %arg2: memref<6x128xf32, #tpu.memory_space<vmem>>, %arg3: memref<1x128xi32, #tpu.memory_space<vmem>>, %arg4: memref<7x6xf32, #tpu.memory_space<vmem>>, %arg5: memref<1x1x128xf32, #tpu.memory_space<vmem>>) attributes {dimension_semantics = [#tpu.dimension_semantics<parallel>, #tpu.dimension_semantics<arbitrary>], iteration_bounds = array<i64: 2, 2>, scalar_prefetch = 0 : i64, scratch_operands = 0 : i64, tpu.core_type = #tpu.core_type<tc>, window_params = [{transform_indices = @transform_0, window_bounds = array<i64: 6, 128>}, {transform_indices = @transform_1, window_bounds = array<i64: 1, 128>}, {pipeline_mode = #tpu.pipeline_mode<synchronous>, transform_indices = @transform_2, window_bounds = array<i64: 7, 6>}, {transform_indices = @transform_3, window_bounds = array<i64: 1, 1, 128>}]} {
    %c0_i32 = arith.constant 0 : i32
    %0 = arith.cmpi eq, %arg1, %c0_i32 : i32
    %1 = arith.extui %0 : i1 to i32
    %c0_i32_0 = arith.constant 0 : i32
    %2 = arith.cmpi ne, %1, %c0_i32_0 : i32
    scf.if %2 {
      %cst_23 = arith.constant 0.000000e+00 : f32
      %68 = vector.broadcast %cst_23 : f32 to vector<1x1x128xf32>
      %c0_24 = arith.constant 0 : index
      %c0_25 = arith.constant 0 : index
      %c0_26 = arith.constant 0 : index
      %69 = vector.load %arg5[%c0_24, %c0_25, %c0_26] : memref<1x1x128xf32, #tpu.memory_space<vmem>>, vector<1x1x128xf32>
      tpu.vector_store %arg5[%c0_24, %c0_25, %c0_26], %68 {strides = array<i32>} : memref<1x1x128xf32, #tpu.memory_space<vmem>>, vector<1x1x128xf32>,
    } else {
    }
    %c0 = arith.constant 0 : index
    %c0_1 = arith.constant 0 : index
    %3 = vector.load %arg2[%c0, %c0_1] : memref<6x128xf32, #tpu.memory_space<vmem>>, vector<6x128xf32>
    %c0_2 = arith.constant 0 : index
    %c0_3 = arith.constant 0 : index
    %4 = vector.load %arg3[%c0_2, %c0_3] : memref<1x128xi32, #tpu.memory_space<vmem>>, vector<1x128xi32>
    %cst = arith.constant dense<0xFF800000> : vector<128xf32>
    %5 = vector.multi_reduction <maximumf>, %3, %cst [0] : vector<6x128xf32> to vector<128xf32>
    %6 = vector.shape_cast %5 : vector<128xf32> to vector<1x128xf32>
    %7 = vector.broadcast %6 : vector<1x128xf32> to vector<6x128xf32>
    %8 = arith.subf %3, %7 : vector<6x128xf32>
    %9 = math.exp %8 : vector<6x128xf32>
    %cst_4 = arith.constant dense<0.000000e+00> : vector<128xf32>
    %10 = vector.multi_reduction <add>, %9, %cst_4 [0] : vector<6x128xf32> to vector<128xf32>
    %11 = vector.shape_cast %10 : vector<128xf32> to vector<1x128xf32>
    %12 = math.log %11 : vector<1x128xf32>
    %13 = vector.broadcast %12 : vector<1x128xf32> to vector<6x128xf32>
    %14 = arith.subf %13, %8 : vector<6x128xf32>
    %15 = vector.shape_cast %4 : vector<1x128xi32> to vector<1x128xi32>
    %16 = vector.broadcast %15 : vector<1x128xi32> to vector<7x128xi32>
    %cst_5 = arith.constant 0.000000e+00 : f32
    %17 = vector.broadcast %cst_5 : f32 to vector<7x128xf32>
    %c0_6 = arith.constant 0 : index
    %c0_7 = arith.constant 0 : index
    %18 = vector.load %arg4[%c0_6, %c0_7] : memref<7x6xf32, #tpu.memory_space<vmem>>, vector<7x1xf32>
    %c0_i32_8 = arith.constant 0 : i32
    %19 = vector.broadcast %c0_i32_8 : i32 to vector<7x128xi32>
    %20 = arith.cmpi eq, %16, %19 : vector<7x128xi32>
    %21 = vector.shape_cast %18 : vector<7x1xf32> to vector<7x1xf32>
    %22 = vector.broadcast %21 : vector<7x1xf32> to vector<7x128xf32>
    %23 = arith.select %20, %22, %17 : vector<7x128xi1>, vector<7x128xf32>
    %c0_9 = arith.constant 0 : index
    %c1 = arith.constant 1 : index
    %24 = vector.load %arg4[%c0_9, %c1] : memref<7x6xf32, #tpu.memory_space<vmem>>, vector<7x1xf32>
    %c1_i32 = arith.constant 1 : i32
    %25 = vector.broadcast %c1_i32 : i32 to vector<7x128xi32>
    %26 = arith.cmpi eq, %16, %25 : vector<7x128xi32>
    %27 = vector.shape_cast %24 : vector<7x1xf32> to vector<7x1xf32>
    %28 = vector.broadcast %27 : vector<7x1xf32> to vector<7x128xf32>
    %29 = arith.select %26, %28, %23 : vector<7x128xi1>, vector<7x128xf32>
    %c0_10 = arith.constant 0 : index
    %c2 = arith.constant 2 : index
    %30 = vector.load %arg4[%c0_10, %c2] : memref<7x6xf32, #tpu.memory_space<vmem>>, vector<7x1xf32>
    %c2_i32 = arith.constant 2 : i32
    %31 = vector.broadcast %c2_i32 : i32 to vector<7x128xi32>
    %32 = arith.cmpi eq, %16, %31 : vector<7x128xi32>
    %33 = vector.shape_cast %30 : vector<7x1xf32> to vector<7x1xf32>
    %34 = vector.broadcast %33 : vector<7x1xf32> to vector<7x128xf32>
    %35 = arith.select %32, %34, %29 : vector<7x128xi1>, vector<7x128xf32>
    %c0_11 = arith.constant 0 : index
    %c3 = arith.constant 3 : index
    %36 = vector.load %arg4[%c0_11, %c3] : memref<7x6xf32, #tpu.memory_space<vmem>>, vector<7x1xf32>
    %c3_i32 = arith.constant 3 : i32
    %37 = vector.broadcast %c3_i32 : i32 to vector<7x128xi32>
    %38 = arith.cmpi eq, %16, %37 : vector<7x128xi32>
    %39 = vector.shape_cast %36 : vector<7x1xf32> to vector<7x1xf32>
    %40 = vector.broadcast %39 : vector<7x1xf32> to vector<7x128xf32>
    %41 = arith.select %38, %40, %35 : vector<7x128xi1>, vector<7x128xf32>
    %c0_12 = arith.constant 0 : index
    %c4 = arith.constant 4 : index
    %42 = vector.load %arg4[%c0_12, %c4] : memref<7x6xf32, #tpu.memory_space<vmem>>, vector<7x1xf32>
    %c4_i32 = arith.constant 4 : i32
    %43 = vector.broadcast %c4_i32 : i32 to vector<7x128xi32>
    %44 = arith.cmpi eq, %16, %43 : vector<7x128xi32>
    %45 = vector.shape_cast %42 : vector<7x1xf32> to vector<7x1xf32>
    %46 = vector.broadcast %45 : vector<7x1xf32> to vector<7x128xf32>
    %47 = arith.select %44, %46, %41 : vector<7x128xi1>, vector<7x128xf32>
    %c0_13 = arith.constant 0 : index
    %c5 = arith.constant 5 : index
    %48 = vector.load %arg4[%c0_13, %c5] : memref<7x6xf32, #tpu.memory_space<vmem>>, vector<7x1xf32>
    %c5_i32 = arith.constant 5 : i32
    %49 = vector.broadcast %c5_i32 : i32 to vector<7x128xi32>
    %50 = arith.cmpi eq, %16, %49 : vector<7x128xi32>
    %51 = vector.shape_cast %48 : vector<7x1xf32> to vector<7x1xf32>
    %52 = vector.broadcast %51 : vector<7x1xf32> to vector<7x128xf32>
    %53 = arith.select %50, %52, %47 : vector<7x128xi1>, vector<7x128xf32>
    %54 = vector.extract_strided_slice %53 {offsets = [0, 0], sizes = [6, 128], strides = [1, 1]} : vector<7x128xf32> to vector<6x128xf32>
    %55 = arith.mulf %54, %14 : vector<6x128xf32>
    %cst_14 = arith.constant dense<0.000000e+00> : vector<128xf32>
    %56 = vector.multi_reduction <add>, %55, %cst_14 [0] : vector<6x128xf32> to vector<128xf32>
    %57 = vector.shape_cast %56 : vector<128xf32> to vector<1x128xf32>
    %58 = vector.extract_strided_slice %53 {offsets = [6, 0], sizes = [1, 128], strides = [1, 1]} : vector<7x128xf32> to vector<1x128xf32>
    %59 = arith.addf %57, %58 : vector<1x128xf32>
    %c0_i32_15 = arith.constant 0 : i32
    %60 = vector.broadcast %c0_i32_15 : i32 to vector<1x128xi32>
    %61 = arith.cmpi sge, %4, %60 : vector<1x128xi32>
    %cst_16 = arith.constant 0.000000e+00 : f32
    %62 = vector.broadcast %cst_16 : f32 to vector<1x128xf32>
    %63 = arith.select %61, %59, %62 : vector<1x128xi1>, vector<1x128xf32>
    %c0_17 = arith.constant 0 : index
    %c0_18 = arith.constant 0 : index
    %c0_19 = arith.constant 0 : index
    %64 = vector.load %arg5[%c0_17, %c0_18, %c0_19] : memref<1x1x128xf32, #tpu.memory_space<vmem>>, vector<1x1x128xf32>
    %65 = vector.shape_cast %63 : vector<1x128xf32> to vector<1x1x128xf32>
    %66 = arith.addf %64, %65 : vector<1x1x128xf32>
    %c0_20 = arith.constant 0 : index
    %c0_21 = arith.constant 0 : index
    %c0_22 = arith.constant 0 : index
    %67 = vector.load %arg5[%c0_20, %c0_21, %c0_22] : memref<1x1x128xf32, #tpu.memory_space<vmem>>, vector<1x1x128xf32>
    tpu.vector_store %arg5[%c0_20, %c0_21, %c0_22], %66 {strides = array<i32>} : memref<1x1x128xf32, #tpu.memory_space<vmem>>, vector<1x1x128xf32>,
    return
  }
  func.func @transform_0(%arg0: i32, %arg1: i32) -> (i32, i32) {
    %c2_i32 = arith.constant 2 : i32
    %0 = arith.muli %arg0, %c2_i32 : i32
    %1 = arith.addi %0, %arg1 : i32
    %c2_i32_0 = arith.constant 2 : i32
    %2 = arith.minsi %1, %c2_i32_0 : i32
    %c0_i32 = arith.constant 0 : i32
    %c0_i32_1 = arith.constant 0 : i32
    return %c0_i32, %2 : i32, i32
  }
  func.func @transform_1(%arg0: i32, %arg1: i32) -> (i32, i32) {
    %c2_i32 = arith.constant 2 : i32
    %0 = arith.muli %arg0, %c2_i32 : i32
    %1 = arith.addi %0, %arg1 : i32
    %c0_i32 = arith.constant 0 : i32
    %c0_i32_0 = arith.constant 0 : i32
    return %c0_i32, %1 : i32, i32
  }
  func.func @transform_2(%arg0: i32, %arg1: i32) -> (i32, i32) {
    %c0_i32 = arith.constant 0 : i32
    %c0_i32_0 = arith.constant 0 : i32
    %c0_i32_1 = arith.constant 0 : i32
    return %c0_i32, %c0_i32_0 : i32, i32
  }
  func.func @transform_3(%arg0: i32, %arg1: i32) -> (i32, i32, i32) {
    %c0_i32 = arith.constant 0 : i32
    %c0_i32_0 = arith.constant 0 : i32
    %c0_i32_1 = arith.constant 0 : i32
    return %arg0, %c0_i32, %c0_i32_0 : i32, i32, i32
  }
}

</mosaic_0001>

<llo_original>
// kernel: loss_fn.1
$region0: #{loss_fn.1}
  #allocation0 [shape = 'u32[]', space=smem, size = 0x4, offset = 0x4, fixed_abs, tag = 'smem constant byte address 0x4 - core index']
  #allocation1 [shape = 'u32[72,128]{1,0:T(1,128)}', space=vmem, size = 0x9000, scoped, tag = 'internal scratch']
  %s0 = inlined_call_operand.hbm [shape: f32[6,300], index: 0, kind: input, shape index: {}]
  %s1 = inlined_call_operand.vmem [shape: s32[1,512], index: 1, kind: input, shape index: {}]
  %s2 = inlined_call_operand.vmem [shape: f32[7,6], index: 2, kind: input, shape index: {}]
  %s3 = inlined_call_operand.vmem [shape: f32[2,1,128], index: 3, kind: output, shape index: {}]
  %s4 = sld [smem:[#allocation0]]
  $region53: #{loss_fn.1} parent=0
    _
  %s6 = ssub.s32 1, %s4
  %s7 = scalar_select 0, %s6, %s4
  $region1: #{loss_fn.1} parent=0
    #allocation2 [shape = 'u8[8192]{0}', space=vmem, size = 0x2000, scoped, tag = 'input window, operand 0']
    #allocation3 [shape = 's32[2]{0}', space=sflag, size = 0x8, scoped, tag = 'scoped memory for loss_fn.1']
    %8 = vsyncpa [#allocation3], 0
    %s9 = scalar_lea.sflag [#allocation3], 1
    %10 = vsyncpa %s9, 0
    loop: start=0, step=1, limit=6
    $region2: #{loss_fn.1} parent=1 // loop_pre_header
      _
    $region3: #{loss_fn.1} parent=1 // loop_header
      %s12 = sphi 0, %s16
      %p13 = scmp.ge.s32.totalorder %s12, 6
      %s19 = sphi 0, %s31
      %s20 = sphi 0, %s27
      %s21 = sphi 0, %s19
      %s22 = sphi 0, %s20
      %s23 = sphi 0, %s21
      %s24 = sphi 0, %s22
      %s42 = sphi 0, %s44
      %s45 = sphi 0, %s42
      %s46 = sphi 0, %s45
      %s62 = sphi 0, %s46
      %s72 = sphi 0, %s74
      %s75 = sphi 0, %s72
      %s76 = sphi 0, %s75
      %s92 = sphi 0, %s76
      %s96 = sphi 0, %s96
      %s98 = sphi 0, %s96
      %s99 = sphi 0, %s98
      %s113 = sphi 0, %s99
      %s119 = sphi 0, %s121
      %s122 = sphi 0, %s119
      %s123 = sphi 0, %s122
      %s139 = sphi 0, %s123
    $region4: #{loss_fn.1} parent=1 // loop_header_branch
      %15 = sbr.rel (%p13) target = $region8
    $region5: #{loss_fn.1} parent=1 // loop_body
      %s17 = ssub.s32 %s12, 1
      %s18 = ssub.s32 %s12, 2
      %s25 = sadd.s32 1, %s20
      %p26 = scmp.ge.s32.totalorder %s25, 2
      %s27 = scalar_select %p26, 0, %s25
      %s28 = sadd.s32 1, %s19
      %s29 = scalar_select %p26, %s28, %s19
      %p30 = scmp.ge.s32.totalorder %s29, 2
      %s31 = scalar_select %p30, 0, %s29
      %s32 = smul.u32 %s19, 2
      %s33 = sadd.s32 %s32, %s20
      %p34 = scmp.lt.s32.totalorder %s33, 2
      %s35 = scalar_select %p34, %s33, 2
      %s36 = smul.u32 %s31, 2
      %s37 = sadd.s32 %s36, %s27
      %p38 = scmp.lt.s32.totalorder %s37, 2
      %s39 = scalar_select %p38, %s37, 2
      %s40 = ssub.s32 %s35, %s39
      %p41 = scmp.eq.s32.totalorder %s40, 0
      %s43 = sadd.s32 %s42, 1
      %s44 = scalar_select %p41, %s42, %s43
      %p47 = pneg %p41
      %p48 = scmp.eq.s32.totalorder %s12, 3
      %p49 = por %p47, %p48
      %p50 = scmp.ne.s32.totalorder %s42, %s45
      %p51 = scmp.eq.s32.totalorder %s12, 0
      %p52 = por %p50, %p51
      %p53 = scmp.ne.s32.totalorder %s42, %s45
      %p54 = scmp.eq.s32.totalorder %s17, 3
      %p55 = por %p53, %p54
      %p56 = scmp.ne.s32.totalorder %s45, %s46
      %p57 = scmp.eq.s32.totalorder %s17, 0
      %p58 = por %p56, %p57
      %p59 = scmp.ne.s32.totalorder %s45, %s46
      %p60 = scmp.eq.s32.totalorder %s18, 3
      %p61 = por %p59, %p60
      %p63 = scmp.ne.s32.totalorder %s46, %s62
      %p64 = scmp.eq.s32.totalorder %s18, 0
      %p65 = por %p63, %p64
      %s66 = smul.u32 %s19, 2
      %s67 = sadd.s32 %s66, %s20
      %s68 = smul.u32 %s31, 2
      %s69 = sadd.s32 %s68, %s27
      %s70 = ssub.s32 %s67, %s69
      %p71 = scmp.eq.s32.totalorder %s70, 0
      %s73 = sadd.s32 %s72, 1
      %s74 = scalar_select %p71, %s72, %s73
      %p77 = pneg %p71
      %p78 = scmp.eq.s32.totalorder %s12, 3
      %p79 = por %p77, %p78
      %p80 = scmp.ne.s32.totalorder %s72, %s75
      %p81 = scmp.eq.s32.totalorder %s12, 0
      %p82 = por %p80, %p81
      %p83 = scmp.ne.s32.totalorder %s72, %s75
      %p84 = scmp.eq.s32.totalorder %s17, 3
      %p85 = por %p83, %p84
      %p86 = scmp.ne.s32.totalorder %s75, %s76
      %p87 = scmp.eq.s32.totalorder %s17, 0
      %p88 = por %p86, %p87
      %p89 = scmp.ne.s32.totalorder %s75, %s76
      %p90 = scmp.eq.s32.totalorder %s18, 3
      %p91 = por %p89, %p90
      %p93 = scmp.ne.s32.totalorder %s76, %s92
      %p94 = scmp.eq.s32.totalorder %s18, 0
      %p95 = por %p93, %p94
      %s97 = sadd.s32 %s96, 1
      %p100 = scmp.eq.s32.totalorder %s12, 3
      %p101 = scmp.ne.s32.totalorder %s96, %s98
      %p102 = scmp.eq.s32.totalorder %s12, 0
      %p103 = por %p101, %p102
      %p104 = scmp.ne.s32.totalorder %s96, %s98
      %p105 = scmp.eq.s32.totalorder %s17, 3
      %p106 = por %p104, %p105
      %p107 = scmp.ne.s32.totalorder %s98, %s99
      %p108 = scmp.eq.s32.totalorder %s17, 0
      %p109 = por %p107, %p108
      %p110 = scmp.ne.s32.totalorder %s98, %s99
      %p111 = scmp.eq.s32.totalorder %s18, 3
      %p112 = por %p110, %p111
      %p114 = scmp.ne.s32.totalorder %s99, %s113
      %p115 = scmp.eq.s32.totalorder %s18, 0
      %p116 = por %p114, %p115
      %s117 = ssub.s32 %s19, %s31
      %p118 = scmp.eq.s32.totalorder %s117, 0
      %s120 = sadd.s32 %s119, 1
      %s121 = scalar_select %p118, %s119, %s120
      %p124 = pneg %p118
      %p125 = scmp.eq.s32.totalorder %s12, 3
      %p126 = por %p124, %p125
      %p127 = scmp.ne.s32.totalorder %s119, %s122
      %p128 = scmp.eq.s32.totalorder %s12, 0
      %p129 = por %p127, %p128
      %p130 = scmp.ne.s32.totalorder %s119, %s122
      %p131 = scmp.eq.s32.totalorder %s17, 3
      %p132 = por %p130, %p131
      %p133 = scmp.ne.s32.totalorder %s122, %s123
      %p134 = scmp.eq.s32.totalorder %s17, 0
      %p135 = por %p133, %p134
      %p136 = scmp.ne.s32.totalorder %s122, %s123
      %p137 = scmp.eq.s32.totalorder %s18, 3
      %p138 = por %p136, %p137
      %p140 = scmp.ne.s32.totalorder %s123, %s139
      %p141 = scmp.eq.s32.totalorder %s18, 0
      %p142 = por %p140, %p141
      %p143 = scmp.le.s32.totalorder 1, %s12
      %p144 = scmp.lt.s32.totalorder %s12, 5
      %p145 = pnand %p143, %p144
      %p146 = pneg %p145
      // Predicated region
      $region9: #{loss_fn.1} parent=5 // pred_check
        _
      $region10: #{loss_fn.1} parent=5 // pred_check_branch
        %148 = sbr.rel (%p145) target = $region12
      $region11: #{loss_fn.1} parent=5 // pred_region
        %s149 = ssub.s32 %s12, 1
        // Predicated region
        $region13: #{loss_fn.1} parent=11 // pred_check
          %p150 = pneg %p109
        $region14: #{loss_fn.1} parent=11 // pred_check_branch
          %152 = sbr.rel (%p150) target = $region16
        $region15: #{loss_fn.1} parent=11 // pred_region
          _
        $region16: #{loss_fn.1} parent=11 // pred_fallthru
          _
      $region12: #{loss_fn.1} parent=5 // pred_fallthru
        _
      %p153 = scmp.lt.s32.totalorder %s12, 4
      // Predicated region
      $region17: #{loss_fn.1} parent=5 // pred_check
        %p154 = pneg %p153
      $region18: #{loss_fn.1} parent=5 // pred_check_branch
        %156 = sbr.rel (%p154) target = $region20
      $region19: #{loss_fn.1} parent=5 // pred_region
        // Predicated region
        $region21: #{loss_fn.1} parent=19 // pred_check
          %p157 = pneg %p52
        $region22: #{loss_fn.1} parent=19 // pred_check_branch
          %159 = sbr.rel (%p157) target = $region24
        $region23: #{loss_fn.1} parent=19 // pred_region
          %s160 = sand.u32 %s42, 1
          %s161 = scalar_lea.sflag [#allocation3], %s160
          %s162 = sand.u32 %s42, 1
          %s163 = smul.addr %s162, 8
          %s164 = scalar_lea.vmem [#allocation2], %s163
          %s165 = smul.u32 %s19, 2
          %s166 = sadd.s32 %s165, %s20
          %p167 = scmp.lt.s32.totalorder %s166, 2
          %s168 = scalar_select %p167, %s166, 2
          %170 = vsyncadd %s161, 0
          %s171 = smul.addr %s168, 8
          %s172 = scalar_lea.hbm %s0, %s171
          %s174 = sshll.u32 %s172, 4
          %s175 = int_to_ptr.hbm [resolvable:$true] %s174
          %s176 = sshll.u32 %s164, 4
          %s177 = int_to_ptr.vmem [resolvable:$true] %s176
          %179 = dma.hbm_to_vmem [thread:$0]  %s175, 128, %s177, %s161
        $region24: #{loss_fn.1} parent=19 // pred_fallthru
          _
        // Predicated region
        $region25: #{loss_fn.1} parent=19 // pred_check
          %p180 = pneg %p82
        $region26: #{loss_fn.1} parent=19 // pred_check_branch
          %182 = sbr.rel (%p180) target = $region28
        $region27: #{loss_fn.1} parent=19 // pred_region
          %s183 = smul.u32 %s19, 2
          %s184 = sadd.s32 %s183, %s20
          %p185 = scmp.lt.s32.totalorder %s184, 3
          %s186 = scalar_select %p185, %s184, 3
          %s187 = scalar_lea.vmem %s1, %s186
          %s188 = smul.u32 %s19, 2
          %s189 = sadd.s32 %s188, %s20
        $region28: #{loss_fn.1} parent=19 // pred_fallthru
          _
      $region20: #{loss_fn.1} parent=5 // pred_fallthru
        _
      %p190 = scmp.le.s32.totalorder 1, %s12
      %p191 = scmp.lt.s32.totalorder %s12, 5
      %p192 = pnand %p190, %p191
      %p193 = pneg %p192
      // Predicated region
      $region29: #{loss_fn.1} parent=5 // pred_check
        _
      $region30: #{loss_fn.1} parent=5 // pred_check_branch
        %195 = sbr.rel (%p192) target = $region32
      $region31: #{loss_fn.1} parent=5 // pred_region
        %s196 = ssub.s32 %s12, 1
        %s197 = sand.u32 %s45, 1
        %s198 = scalar_lea.sflag [#allocation3], %s197
        %s199 = sand.u32 %s45, 1
        %s200 = smul.addr %s199, 8
        %s201 = scalar_lea.vmem [#allocation2], %s200
        // Predicated region
        $region33: #{loss_fn.1} parent=31 // pred_check
          %p202 = pneg %p58
        $region34: #{loss_fn.1} parent=31 // pred_check_branch
          %204 = sbr.rel (%p202) target = $region36
        $region35: #{loss_fn.1} parent=31 // pred_region
          %206 = dma.done %s198, 128
        $region36: #{loss_fn.1} parent=31 // pred_fallthru
          _
        %s207 = sand.u32 %s45, 1
        %s208 = scalar_lea.sflag [#allocation3], %s207
        %s209 = sand.u32 %s45, 1
        %s210 = smul.addr %s209, 8
        %s211 = scalar_lea.vmem [#allocation2], %s210
        %p212 = pneg %p58
        %p213 = pneg %p55
        %s214 = smul.u32 %s21, 2
        %s215 = sadd.s32 %s214, %s22
        %p216 = scmp.lt.s32.totalorder %s215, 3
        %s217 = scalar_select %p216, %s215, 3
        %s218 = scalar_lea.vmem %s1, %s217
        %p219 = pneg %p88
        %p220 = pneg %p85
        %p221 = pneg %p109
        %p222 = pneg %p106
        %p223 = pneg %p135
        %p224 = pneg %p132
        %p225 = scmp.lt.s32.totalorder %s21, 1
        %s226 = scalar_select %p225, %s21, 1
        %s227 = scalar_lea.vmem %s3, %s226
        %s228 = smul.u32 %s21, 2
        %s229 = sadd.s32 %s228, %s22
        %p230 = scmp.lt.s32.totalorder %s229, 2
        %s231 = scalar_select %p230, %s229, 2
        %s232 = smul.u32 %s21, 2
        %s233 = sadd.s32 %s232, %s22
        %p234 = scmp.lt.s32.totalorder %s233, 3
        %s235 = scalar_select %p234, %s233, 3
        %s236 = scalar_lea.vmem %s1, %s235
        %s237 = smul.u32 %s21, 2
        %s238 = sadd.s32 %s237, %s22
        %p239 = scmp.lt.s32.totalorder %s21, 1
        %s240 = scalar_select %p239, %s21, 1
        %s241 = scalar_lea.vmem %s3, %s240
        %p242 = scmp.eq.s32.totalorder %s22, 0
        // Predicated region
        $region37: #{loss_fn.1} parent=31 // pred_check
          %p243 = pneg %p242
        $region38: #{loss_fn.1} parent=31 // pred_check_branch
          %245 = sbr.rel (%p243) target = $region40
        $region39: #{loss_fn.1} parent=31 // pred_region
          %246 = vst [vmem:[%s241] sm:$0x1] 0.0
        $region40: #{loss_fn.1} parent=31 // pred_fallthru
          _
        %v247 = vld [vmem:[%s201] sm:$0x3f]
        %v248 = vld [vmem:[%s236] sm:$0x1]
        %vm249 = vcmask 1045504
        %v250 = vsel %vm249, %v247, -inf
        %v251 = vrot.slane %v250, 4
        %v252 = vmax.f32 %v250, %v251
        %v253 = vrot.slane %v252, 2
        %v254 = vmax.f32 %v252, %v253
        %v255 = vrot.slane %v254, 1
        %v256 = vmax.f32 %v254, %v255
        %v257 = vsub.f32 %v247, %v256
        %v258 = vmul.f32 %v257, 1.442695
        %v259 = vpow.pop %v258
        %v260 = vsel %vm249, %v259, 0.0
        %v261 = vrot.slane %v260, 4
        %v262 = vadd.f32 %v260, %v261
        %v263 = vrot.slane %v262, 2
        %v264 = vadd.f32 %v262, %v263
        %v265 = vrot.slane %v264, 1
        %v266 = vadd.f32 %v264, %v265
        %v267 = vlog2.pop %v266
        %v268 = vmul.f32 %v267, 0.6931472
        %v269 = vsub.f32 %v268, %v257
        %v270 = vperm.slane %v248, 0
        %v271 = vld [vmem:[%s2] sm:$0x7f]
        %vm272 = vcmp.eq.s32.totalorder %v270, 0
        %274 = vset.pattern.permute.xlu0 0
        %275 = vperm.xlu0 %274, %v271
        %v276 = vpop.permute.xlu0 %275
        %v278 = vsel %vm272, %v276, 0.0
        %vm279 = vcmp.eq.s32.totalorder %v270, 1
        %280 = vset.pattern.permute.xlu0 1
        %281 = vperm.xlu0 %280, %v271
        %v282 = vpop.permute.xlu0 %281
        %v284 = vsel %vm279, %v282, %v278
        %vm285 = vcmp.eq.s32.totalorder %v270, 2
        %286 = vset.pattern.permute.xlu0 2
        %287 = vperm.xlu0 %286, %v271
        %v288 = vpop.permute.xlu0 %287
        %v290 = vsel %vm285, %v288, %v284
        %vm291 = vcmp.eq.s32.totalorder %v270, 3
        %292 = vset.pattern.permute.xlu0 3
        %293 = vperm.xlu0 %292, %v271
        %v294 = vpop.permute.xlu0 %293
        %v296 = vsel %vm291, %v294, %v290
        %vm297 = vcmp.eq.s32.totalorder %v270, 4
        %298 = vset.pattern.permute.xlu0 4
        %299 = vperm.xlu0 %298, %v271
        %v300 = vpop.permute.xlu0 %299
        %v302 = vsel %vm297, %v300, %v296
        %vm303 = vcmp.eq.s32.totalorder %v270, 5
        %304 = vset.pattern.permute.xlu0 5
        %305 = vperm.xlu0 %304, %v271
        %v306 = vpop.permute.xlu0 %305
        %v308 = vsel %vm303, %v306, %v302
        %v309 = vmul.f32 %v308, %v269
        %v310 = vsel %vm249, %v309, 0.0
        %v311 = vrot.slane %v310, 4
        %v312 = vadd.f32 %v310, %v311
        %v313 = vrot.slane %v312, 2
        %v314 = vadd.f32 %v312, %v313
        %v315 = vrot.slane %v314, 1
        %v316 = vadd.f32 %v314, %v315
        %v317 = vadd.f32 %v316, %v308
        %vm318 = vcmp.ge.s32.totalorder %v248, 0
        %320 = vst [vmem:[#allocation1] sm:$0xff] %v317
        %s321 = scalar_lea.vmem [#allocation1], 6
        %v322 = vld [vmem:[%s321] ss:$9 sm:$0xff]
        %v324 = vsel %vm318, %v322, 0.0
        %v325 = vld [vmem:[%s241] sm:$0x1]
        %v326 = vadd.f32 %v325, %v324
        %327 = vst [vmem:[%s241] sm:$0x1] %v326
        %p328 = scmp.lt.s32.totalorder %s21, 1
        %s329 = scalar_select %p328, %s21, 1
        %s330 = scalar_lea.vmem %s3, %s329
        // Predicated region
        $region41: #{loss_fn.1} parent=31 // pred_check
          %p331 = pneg %p132
        $region42: #{loss_fn.1} parent=31 // pred_check_branch
          %333 = sbr.rel (%p331) target = $region44
        $region43: #{loss_fn.1} parent=31 // pred_region
          _
        $region44: #{loss_fn.1} parent=31 // pred_fallthru
          _
      $region32: #{loss_fn.1} parent=5 // pred_fallthru
        _
      %p334 = scmp.le.s32.totalorder 2, %s12
      // Predicated region
      $region45: #{loss_fn.1} parent=5 // pred_check
        %p335 = pneg %p334
      $region46: #{loss_fn.1} parent=5 // pred_check_branch
        %337 = sbr.rel (%p335) target = $region48
      $region47: #{loss_fn.1} parent=5 // pred_region
        %s338 = ssub.s32 %s12, 2
        // Predicated region
        $region49: #{loss_fn.1} parent=47 // pred_check
          %p339 = pneg %p138
        $region50: #{loss_fn.1} parent=47 // pred_check_branch
          %341 = sbr.rel (%p339) target = $region52
        $region51: #{loss_fn.1} parent=47 // pred_region
          %p342 = scmp.lt.s32.totalorder %s23, 1
          %s343 = scalar_select %p342, %s23, 1
          %s344 = scalar_lea.vmem %s3, %s343
        $region52: #{loss_fn.1} parent=47 // pred_fallthru
          _
      $region48: #{loss_fn.1} parent=5 // pred_fallthru
        _
    $region6: #{loss_fn.1} parent=1 // loop_footer
      %s16 = sadd.s32 1, %s12
    $region7: #{loss_fn.1} parent=1 // loop_footer_branch
      %11 = sbr.rel target = $region3
    $region8: #{loss_fn.1} parent=1 // loop_exit
      _
    %345 = vsyncpa [#allocation3], 1
    %s346 = scalar_lea.sflag [#allocation3], 1
    %347 = vsyncpa %s346, 1

</llo_original>
